<compile_context>
chip_gen: v7x
topology: tpu7x:2x2x1
jax: 0.10.0
libtpu: 0.0.40
codegen_flags: <defaults>
</compile_context>

<pallas_src>
import jax
import jax.numpy as jnp
from jax.experimental import pallas as pl
from jax.experimental.pallas import tpu as pltpu


# --------------------------------------------------------------------------
# Kernel
# --------------------------------------------------------------------------
def _sigmoid(z):
    # sigmoid(z) == 0.5 * (1 + tanh(z / 2)); exact, and one EUP op instead of
    # exp + reciprocal.
    return 0.5 * (1.0 + jnp.tanh(0.5 * z))


def gated_gcn_kernel(adj_ref, xres_ref, xrow_ref, wy_ref, wux_ref, wxx_ref,
                     b_ref, out_ref, y_acc):
    """Grid = (batch blocks, row tiles, K tiles); K (axis 2) is the reduction.

    adj_ref : (TB, TM, TK)  f32  (cast to MXU dtype in-kernel)
    xres_ref: (TB, TK, Dp)  f32  (contraction operand, cast in-kernel)
    xrow_ref: (TB, TM, Dp)  f32  (x rows for gates / final blend)
    wy_ref  : (Dp, 3*Dp)    mxu dtype   [Wu_y | Wr_y | Wx_y]
    wux_ref : (Dp, 2*Dp)    mxu dtype   [Wu_x | Wr_x]
    wxx_ref : (Dp, Dp)      mxu dtype    Wx_x
    b_ref   : (1, 3*Dp)     f32          [bu | br | bx]
    out_ref : (TB, TM, Dp)
    y_acc   : (TB, TM, Dp)  f32 VMEM scratch (y accumulator across K)
    """
    k = pl.program_id(2)
    mxu_dtype = wy_ref.dtype
    tb, tm, dp = out_ref.shape

    @pl.when(k == 0)
    def _init():
        y_acc[...] = jnp.zeros_like(y_acc)

    # Partial message passing: y += adj_tile @ x_tile, f32 MXU accumulation.
    # adj arrives as f32 straight from HBM; the cast happens here on the VPU
    # instead of a separate HBM pad/convert pass in the wrapper.
    y_acc[...] += jnp.einsum(
        'bms,bsd->bmd',
        adj_ref[...].astype(mxu_dtype),
        xres_ref[...].astype(mxu_dtype),
        preferred_element_type=jnp.float32)

    @pl.when(k == pl.num_programs(2) - 1)
    def _epilogue():
        m = tb * tm
        # Cast y once, at the accumulator read, for the fused gate matmuls.
        y2 = y_acc[...].reshape(m, dp).astype(mxu_dtype)
        x2 = xrow_ref[...].reshape(m, dp)                       # f32 rows

        # Concat-free split of cat([y, x]) @ W  /  cat([y, r*x]) @ Wx.
        py = jnp.dot(y2, wy_ref[...],
                     preferred_element_type=jnp.float32) + b_ref[...]
        px = jnp.dot(x2.astype(mxu_dtype), wux_ref[...],
                     preferred_element_type=jnp.float32)

        u = _sigmoid(py[:, :dp] + px[:, :dp])
        r = _sigmoid(py[:, dp:2 * dp] + px[:, dp:])

        prx = jnp.dot((r * x2).astype(mxu_dtype), wxx_ref[...],
                      preferred_element_type=jnp.float32)
        x_bar = jnp.tanh(py[:, 2 * dp:] + prx)

        out = (1.0 - u) * x2 + u * x_bar
        out_ref[...] = out.reshape(tb, tm, dp).astype(out_ref.dtype)


# --------------------------------------------------------------------------
# Wrapper
# --------------------------------------------------------------------------
def _round_up(n, m):
    return ((n + m - 1) // m) * m


def _largest_divisor_leq(n, cap):
    cap = max(1, min(n, cap))
    for d in range(cap, 0, -1):
        if n % d == 0:
            return d
    return 1


def _vmem_budget_bytes():
    # Generation-aware budget (leave ~25% headroom): ~48 MiB on v7x,
    # ~96 MiB on v5e/v6e.  Fallback is only for the hardware query itself.
    try:
        cap = pltpu.get_tpu_info().vmem_capacity_bytes
    except Exception:
        cap = 64 << 20
    return int(cap) * 3 // 4


def _choose_tiles(B, Sp, Dp, budget_bytes, w_itemsize, adj_bufs):
    """Back-solve (TB, TM, TK) from the VMEM budget. Prefers big row/K tiles."""
    if Sp <= 512:
        tm_opts = [Sp]          # one row tile, no K split needed
        tk_opts = [Sp]
    else:                       # Sp is a multiple of 128 here
        tm_opts = [t for t in (512, 256, 128) if Sp % t == 0]
        tk_opts = [t for t in (1024, 512, 256, 128) if Sp % t == 0]

    f32 = 4

    def est(tb, tm, tk):
        return (adj_bufs * tb * tm * tk * f32      # adj tiles (f32 in VMEM)
                + 2 * tb * tk * Dp * f32           # xres tiles
                + 2 * tb * tm * Dp * f32           # xrow tiles
                + 2 * tb * tm * Dp * f32           # out tiles
                + tb * tm * Dp * f32               # y accumulator scratch
                + 10 * tb * tm * Dp * f32          # epilogue temporaries
                + 6 * Dp * Dp * w_itemsize         # fused weights (1 buffer)
                + 3 * Dp * f32)                    # fused bias

    for tm in tm_opts:
        for tk in tk_opts:
            tb = _largest_divisor_leq(B, max(1, 512 // tm))   # <=512 rows/step
            while tb >= 1:
                if est(tb, tm, tk) <= budget_bytes:
                    return tb, tm, tk, est(tb, tm, tk)
                if tb == 1:
                    break
                tb = _largest_divisor_leq(B, tb - 1)
    tm, tk = tm_opts[-1], tk_opts[-1]
    return 1, tm, tk, est(1, tm, tk)


def gated_gcn(x, adj, params, *, mxu_dtype=jnp.bfloat16):
    """x: (B, S, D) f32, adj: (B, S, S) f32.

    params = (wu, bu, wr, br, wx, bx): weights (2D, D) in right-multiply
    layout (nn.Linear.weight transposed), biases (1, D).
    """
    B, S, D = x.shape
    wu, bu, wr, br, wx, bx = params

    # ---- padding / tiling ---------------------------------------------------
    Dp = _round_up(D, 128)                       # lane-dense hidden dim
    Sp = _round_up(S, 8) if S <= 512 else _round_up(S, 128)
    dD, dS = Dp - D, Sp - S

    budget = _vmem_budget_bytes()
    adj_bufs = 3 if budget >= (80 << 20) else 2  # deeper adj pipe on v5e/v6e
    w_itm = jnp.dtype(mxu_dtype).itemsize
    TB, TM, TK, est_vmem = _choose_tiles(B, Sp, Dp, budget, w_itm, adj_bufs)

    # adj stays f32 (no wrapper-side cast pass); pad only when needed.
    adj_p = adj if dS == 0 else jnp.pad(adj, ((0, 0), (0, dS), (0, dS)))
    x_p = x if (dS == 0 and dD == 0) else jnp.pad(x, ((0, 0), (0, dS), (0, dD)))

    def pad_w(w):          # (D, D) -> (Dp, Dp)
        return w if dD == 0 else jnp.pad(w, ((0, dD), (0, dD)))

    def pad_b(b):          # (1, D) -> (1, Dp)
        return b if dD == 0 else jnp.pad(b, ((0, 0), (0, dD)))

    # Fused weight layout (split of cat([y, x]) @ W):
    #   W_y  = [Wu_y | Wr_y | Wx_y]  (Dp, 3Dp)   multiplies y
    #   W_ux = [Wu_x | Wr_x]         (Dp, 2Dp)   multiplies x
    #   W_xx = Wx_x                  (Dp, Dp)    multiplies r*x
    w_y = jnp.concatenate([pad_w(wu[:D]), pad_w(wr[:D]), pad_w(wx[:D])],
                          axis=1).astype(mxu_dtype)
    w_ux = jnp.concatenate([pad_w(wu[D:]), pad_w(wr[D:])],
                           axis=1).astype(mxu_dtype)
    w_xx = pad_w(wx[D:]).astype(mxu_dtype)
    b_all = jnp.concatenate([pad_b(bu), pad_b(br), pad_b(bx)],
                            axis=1).astype(jnp.float32)

    grid = (B // TB, Sp // TM, Sp // TK)         # b (parallel) first: megacore
                                                 # sharding lands on batch.

    if adj_bufs == 3:
        adj_spec = pl.BlockSpec((TB, TM, TK), lambda b, i, k: (b, i, k),
                                pipeline_mode=pl.Buffered(3))
    else:
        adj_spec = pl.BlockSpec((TB, TM, TK), lambda b, i, k: (b, i, k))
    xres_spec = pl.BlockSpec((TB, TK, Dp), lambda b, i, k: (b, k, 0))
    xrow_spec = pl.BlockSpec((TB, TM, Dp), lambda b, i, k: (b, i, 0))
    out_spec = pl.BlockSpec((TB, TM, Dp), lambda b, i, k: (b, i, 0))

    # Loop-invariant operands: single buffer (no wasted second VMEM copy).
    one_buf = pl.Buffered(1)
    wy_spec = pl.BlockSpec((Dp, 3 * Dp), lambda b, i, k: (0, 0),
                           pipeline_mode=one_buf)
    wux_spec = pl.BlockSpec((Dp, 2 * Dp), lambda b, i, k: (0, 0),
                            pipeline_mode=one_buf)
    wxx_spec = pl.BlockSpec((Dp, Dp), lambda b, i, k: (0, 0),
                            pipeline_mode=one_buf)
    b_spec = pl.BlockSpec((1, 3 * Dp), lambda b, i, k: (0, 0),
                          pipeline_mode=one_buf)

    # Advisory cost estimate for XLA's scheduler.
    flops = 2 * B * Sp * Sp * Dp + 2 * B * Sp * Dp * (6 * Dp)
    bytes_accessed = (B * Sp * Sp * 4                        # adj (f32, once)
                      + (Sp // TM) * B * Sp * Dp * 4         # xres re-reads
                      + B * Sp * Dp * 4                      # xrow
                      + (w_y.size + w_ux.size + w_xx.size) * w_itm
                      + b_all.size * 4
                      + B * Sp * Dp * 4)                     # out
    cost = pl.CostEstimate(flops=int(flops),
                           transcendentals=int(3 * B * Sp * Dp),
                           bytes_accessed=int(bytes_accessed))

    out_p = pl.pallas_call(
        gated_gcn_kernel,
        out_shape=jax.ShapeDtypeStruct((B, Sp, Dp), x.dtype),
        grid_spec=pltpu.PrefetchScalarGridSpec(
            num_scalar_prefetch=0,
            grid=grid,
            in_specs=[adj_spec, xres_spec, xrow_spec,
                      wy_spec, wux_spec, wxx_spec, b_spec],
            out_specs=out_spec,
            scratch_shapes=[pltpu.VMEM((TB, TM, Dp), jnp.float32)]),
        compiler_params=pltpu.CompilerParams(
            dimension_semantics=("parallel", "parallel", "arbitrary"),
            vmem_limit_bytes=int(max(budget, est_vmem))),
        cost_estimate=cost,
    )(adj_p, x_p, x_p, w_y, w_ux, w_xx, b_all)

    return out_p[:, :S, :D]


# --------------------------------------------------------------------------
# Pure-JAX reference and parameter init
# --------------------------------------------------------------------------
def gated_gcn_ref(x, adj, params):
    wu, bu, wr, br, wx, bx = params
    y = jnp.einsum('bij,bjd->bid', adj, x)
    cat_yx = jnp.concatenate([y, x], axis=-1)
    u = jax.nn.sigmoid(cat_yx @ wu + bu)
    r = jax.nn.sigmoid(cat_yx @ wr + br)
    cat_yrx = jnp.concatenate([y, r * x], axis=-1)
    x_bar = jnp.tanh(cat_yrx @ wx + bx)
    return (1.0 - u) * x + u * x_bar


def init_params(key, hidden_size):
    """Deterministic init; weights stored as (2D, D) for right-multiply."""
    D = hidden_size
    keys = jax.random.split(key, 6)
    scale = 1.0 / jnp.sqrt(2.0 * D)
    wu = jax.random.uniform(keys[0], (2 * D, D), jnp.float32, -scale, scale)
    bu = jax.random.uniform(keys[1], (1, D), jnp.float32, -scale, scale)
    wr = jax.random.uniform(keys[2], (2 * D, D), jnp.float32, -scale, scale)
    br = jax.random.uniform(keys[3], (1, D), jnp.float32, -scale, scale)
    wx = jax.random.uniform(keys[4], (2 * D, D), jnp.float32, -scale, scale)
    bx = jax.random.uniform(keys[5], (1, D), jnp.float32, -scale, scale)
    return (wu, bu, wr, br, wx, bx)


if __name__ == "__main__":
    B, S, D = 2, 8, 32
    key = jax.random.PRNGKey(0)
    kx, kadj, kp = jax.random.split(key, 3)

    x = jax.random.normal(kx, (B, S, D), jnp.float32)
    # Row-normalized random adjacency-like matrix.
    adj_raw = jax.random.uniform(kadj, (B, S, S), jnp.float32)
    adj = adj_raw / jnp.sum(adj_raw, axis=-1, keepdims=True)

    params = init_params(kp, D)
    with jax.default_matmul_precision("highest"):
        ref = jax.block_until_ready(gated_gcn_ref(x, adj, params))

    # f32-MXU path (tolerance allows for MXU multi-pass decomposition).
    out_f32 = jax.block_until_ready(
        gated_gcn(x, adj, params, mxu_dtype=jnp.float32))
    assert out_f32.shape == (B, S, D)
    assert jnp.allclose(out_f32, ref, atol=2e-3, rtol=2e-3), \
        "f32 kernel mismatch vs JAX reference"

    # bf16-MXU fast path (f32 accumulation / gates / blend).
    out_bf16 = jax.block_until_ready(
        gated_gcn(x, adj, params, mxu_dtype=jnp.bfloat16))
    assert out_bf16.shape == (B, S, D)
    assert jnp.allclose(out_bf16, ref, atol=5e-2, rtol=5e-2), \
        "bf16-MXU kernel mismatch vs JAX reference"

    print("KERNEL_OK")
</pallas_src>

<mosaic_0001>
module attributes {stable_mosaic.version = 11 : i64} {
  func.func @gated_gcn_kernel(%arg0: i32, %arg1: i32, %arg2: i32, %arg3: memref<2x8x8xf32, #tpu.memory_space<vmem>>, %arg4: memref<2x8x128xf32, #tpu.memory_space<vmem>>, %arg5: memref<2x8x128xf32, #tpu.memory_space<vmem>>, %arg6: memref<128x384xf32, #tpu.memory_space<vmem>>, %arg7: memref<128x256xf32, #tpu.memory_space<vmem>>, %arg8: memref<128x128xf32, #tpu.memory_space<vmem>>, %arg9: memref<1x384xf32, #tpu.memory_space<vmem>>, %arg10: memref<2x8x128xf32, #tpu.memory_space<vmem>>, %arg11: memref<2x8x128xf32, #tpu.memory_space<vmem>>) attributes {dimension_semantics = [#tpu.dimension_semantics<parallel>, #tpu.dimension_semantics<parallel>, #tpu.dimension_semantics<arbitrary>], iteration_bounds = array<i64: 1, 1, 1>, scalar_prefetch = 0 : i64, scratch_operands = 1 : i64, tpu.core_type = #tpu.core_type<tc>, window_params = [{transform_indices = @transform_0, window_bounds = array<i64: 2, 8, 8>}, {transform_indices = @transform_1, window_bounds = array<i64: 2, 8, 128>}, {transform_indices = @transform_2, window_bounds = array<i64: 2, 8, 128>}, {pipeline_mode = #tpu.pipeline_mode<synchronous>, transform_indices = @transform_3, window_bounds = array<i64: 128, 384>}, {pipeline_mode = #tpu.pipeline_mode<synchronous>, transform_indices = @transform_4, window_bounds = array<i64: 128, 256>}, {pipeline_mode = #tpu.pipeline_mode<synchronous>, transform_indices = @transform_5, window_bounds = array<i64: 128, 128>}, {pipeline_mode = #tpu.pipeline_mode<synchronous>, transform_indices = @transform_6, window_bounds = array<i64: 1, 384>}, {transform_indices = @transform_7, window_bounds = array<i64: 2, 8, 128>}]} {
    %c0_i32 = arith.constant 0 : i32
    %0 = arith.cmpi eq, %arg2, %c0_i32 : i32
    %1 = arith.extui %0 : i1 to i32
    %c0_i32_0 = arith.constant 0 : i32
    %2 = arith.cmpi ne, %1, %c0_i32_0 : i32
    scf.if %2 {
      %cst_14 = arith.constant 0.000000e+00 : f32
      %12 = vector.broadcast %cst_14 : f32 to vector<2x8x128xf32>
      %c0_15 = arith.constant 0 : index
      %c0_16 = arith.constant 0 : index
      %c0_17 = arith.constant 0 : index
      %13 = vector.load %arg11[%c0_15, %c0_16, %c0_17] : memref<2x8x128xf32, #tpu.memory_space<vmem>>, vector<2x8x128xf32>
      tpu.vector_store %arg11[%c0_15, %c0_16, %c0_17], %12 {strides = array<i32>} : memref<2x8x128xf32, #tpu.memory_space<vmem>>, vector<2x8x128xf32>,
    } else {
    }
    %c0 = arith.constant 0 : index
    %c0_1 = arith.constant 0 : index
    %c0_2 = arith.constant 0 : index
    %3 = vector.load %arg11[%c0, %c0_1, %c0_2] : memref<2x8x128xf32, #tpu.memory_space<vmem>>, vector<2x8x128xf32>
    %c0_3 = arith.constant 0 : index
    %c0_4 = arith.constant 0 : index
    %c0_5 = arith.constant 0 : index
    %4 = vector.load %arg3[%c0_3, %c0_4, %c0_5] : memref<2x8x8xf32, #tpu.memory_space<vmem>>, vector<2x8x8xf32>
    %c0_6 = arith.constant 0 : index
    %c0_7 = arith.constant 0 : index
    %c0_8 = arith.constant 0 : index
    %5 = vector.load %arg4[%c0_6, %c0_7, %c0_8] : memref<2x8x128xf32, #tpu.memory_space<vmem>>, vector<2x8x128xf32>
    "tpu.trace_start"() <{level = 10 : i32, message = "bms,bsd->bmd"}> : () -> ()
    %cst = arith.constant dense<0.000000e+00> : vector<2x8x128xf32>
    %6 = tpu.matmul %4, %5, %cst {dimension_numbers = #tpu.dot_dimension_numbers<[2], [1], [1], [2], [0, 0, 0, 1, 1, 2], [0], [0]>} : vector<2x8x8xf32>, vector<2x8x128xf32>, vector<2x8x128xf32> -> vector<2x8x128xf32>
    "tpu.trace_stop"() : () -> ()
    %7 = arith.addf %3, %6 : vector<2x8x128xf32>
    %c0_9 = arith.constant 0 : index
    %c0_10 = arith.constant 0 : index
    %c0_11 = arith.constant 0 : index
    %8 = vector.load %arg11[%c0_9, %c0_10, %c0_11] : memref<2x8x128xf32, #tpu.memory_space<vmem>>, vector<2x8x128xf32>
    tpu.vector_store %arg11[%c0_9, %c0_10, %c0_11], %7 {strides = array<i32>} : memref<2x8x128xf32, #tpu.memory_space<vmem>>, vector<2x8x128xf32>,
    %c0_i32_12 = arith.constant 0 : i32
    %9 = arith.cmpi eq, %arg2, %c0_i32_12 : i32
    %10 = arith.extui %9 : i1 to i32
    %c0_i32_13 = arith.constant 0 : i32
    %11 = arith.cmpi ne, %10, %c0_i32_13 : i32
    scf.if %11 {
      %c0_14 = arith.constant 0 : index
      %c0_15 = arith.constant 0 : index
      %c0_16 = arith.constant 0 : index
      %12 = vector.load %arg11[%c0_14, %c0_15, %c0_16] : memref<2x8x128xf32, #tpu.memory_space<vmem>>, vector<2x8x128xf32>
      %13 = vector.shape_cast %12 : vector<2x8x128xf32> to vector<16x128xf32>
      %c0_17 = arith.constant 0 : index
      %c0_18 = arith.constant 0 : index
      %c0_19 = arith.constant 0 : index
      %14 = vector.load %arg5[%c0_17, %c0_18, %c0_19] : memref<2x8x128xf32, #tpu.memory_space<vmem>>, vector<2x8x128xf32>
      %15 = vector.shape_cast %14 : vector<2x8x128xf32> to vector<16x128xf32>
      %c0_20 = arith.constant 0 : index
      %c0_21 = arith.constant 0 : index
      %16 = vector.load %arg6[%c0_20, %c0_21] : memref<128x384xf32, #tpu.memory_space<vmem>>, vector<128x384xf32>
      %cst_22 = arith.constant dense<0.000000e+00> : vector<16x384xf32>
      %17 = tpu.matmul %13, %16, %cst_22 {dimension_numbers = #tpu.dot_dimension_numbers<[1], [0], [0], [1], [0, 0, 1, 1], [], []>} : vector<16x128xf32>, vector<128x384xf32>, vector<16x384xf32> -> vector<16x384xf32>
      %c0_23 = arith.constant 0 : index
      %c0_24 = arith.constant 0 : index
      %18 = vector.load %arg9[%c0_23, %c0_24] : memref<1x384xf32, #tpu.memory_space<vmem>>, vector<1x384xf32>
      %19 = vector.broadcast %18 : vector<1x384xf32> to vector<16x384xf32>
      %20 = arith.addf %17, %19 : vector<16x384xf32>
      %c0_25 = arith.constant 0 : index
      %c0_26 = arith.constant 0 : index
      %21 = vector.load %arg7[%c0_25, %c0_26] : memref<128x256xf32, #tpu.memory_space<vmem>>, vector<128x256xf32>
      %cst_27 = arith.constant dense<0.000000e+00> : vector<16x256xf32>
      %22 = tpu.matmul %15, %21, %cst_27 {dimension_numbers = #tpu.dot_dimension_numbers<[1], [0], [0], [1], [0, 0, 1, 1], [], []>} : vector<16x128xf32>, vector<128x256xf32>, vector<16x256xf32> -> vector<16x256xf32>
      %23 = vector.extract_strided_slice %20 {offsets = [0, 0], sizes = [16, 128], strides = [1, 1]} : vector<16x384xf32> to vector<16x128xf32>
      %24 = vector.extract_strided_slice %22 {offsets = [0, 0], sizes = [16, 128], strides = [1, 1]} : vector<16x256xf32> to vector<16x128xf32>
      %25 = arith.addf %23, %24 : vector<16x128xf32>
      %cst_28 = arith.constant 5.000000e-01 : f32
      %26 = vector.broadcast %cst_28 : f32 to vector<16x128xf32>
      %27 = arith.mulf %26, %25 : vector<16x128xf32>
      %28 = math.tanh %27 : vector<16x128xf32>
      %cst_29 = arith.constant 1.000000e+00 : f32
      %29 = vector.broadcast %cst_29 : f32 to vector<16x128xf32>
      %30 = arith.addf %29, %28 : vector<16x128xf32>
      %cst_30 = arith.constant 5.000000e-01 : f32
      %31 = vector.broadcast %cst_30 : f32 to vector<16x128xf32>
      %32 = arith.mulf %31, %30 : vector<16x128xf32>
      %33 = vector.extract_strided_slice %20 {offsets = [0, 128], sizes = [16, 128], strides = [1, 1]} : vector<16x384xf32> to vector<16x128xf32>
      %34 = vector.extract_strided_slice %22 {offsets = [0, 128], sizes = [16, 128], strides = [1, 1]} : vector<16x256xf32> to vector<16x128xf32>
      %35 = arith.addf %33, %34 : vector<16x128xf32>
      %cst_31 = arith.constant 5.000000e-01 : f32
      %36 = vector.broadcast %cst_31 : f32 to vector<16x128xf32>
      %37 = arith.mulf %36, %35 : vector<16x128xf32>
      %38 = math.tanh %37 : vector<16x128xf32>
      %cst_32 = arith.constant 1.000000e+00 : f32
      %39 = vector.broadcast %cst_32 : f32 to vector<16x128xf32>
      %40 = arith.addf %39, %38 : vector<16x128xf32>
      %cst_33 = arith.constant 5.000000e-01 : f32
      %41 = vector.broadcast %cst_33 : f32 to vector<16x128xf32>
      %42 = arith.mulf %41, %40 : vector<16x128xf32>
      %43 = arith.mulf %42, %15 : vector<16x128xf32>
      %c0_34 = arith.constant 0 : index
      %c0_35 = arith.constant 0 : index
      %44 = vector.load %arg8[%c0_34, %c0_35] : memref<128x128xf32, #tpu.memory_space<vmem>>, vector<128x128xf32>
      %cst_36 = arith.constant dense<0.000000e+00> : vector<16x128xf32>
      %45 = tpu.matmul %43, %44, %cst_36 {dimension_numbers = #tpu.dot_dimension_numbers<[1], [0], [0], [1], [0, 0, 1, 1], [], []>} : vector<16x128xf32>, vector<128x128xf32>, vector<16x128xf32> -> vector<16x128xf32>
      %46 = vector.extract_strided_slice %20 {offsets = [0, 256], sizes = [16, 128], strides = [1, 1]} : vector<16x384xf32> to vector<16x128xf32>
      %47 = arith.addf %46, %45 : vector<16x128xf32>
      %48 = math.tanh %47 : vector<16x128xf32>
      %cst_37 = arith.constant 1.000000e+00 : f32
      %49 = vector.broadcast %cst_37 : f32 to vector<16x128xf32>
      %50 = arith.subf %49, %32 : vector<16x128xf32>
      %51 = arith.mulf %50, %15 : vector<16x128xf32>
      %52 = arith.mulf %32, %48 : vector<16x128xf32>
      %53 = arith.addf %51, %52 : vector<16x128xf32>
      %54 = vector.shape_cast %53 : vector<16x128xf32> to vector<2x8x128xf32>
      %c0_38 = arith.constant 0 : index
      %c0_39 = arith.constant 0 : index
      %c0_40 = arith.constant 0 : index
      %55 = vector.load %arg10[%c0_38, %c0_39, %c0_40] : memref<2x8x128xf32, #tpu.memory_space<vmem>>, vector<2x8x128xf32>
      tpu.vector_store %arg10[%c0_38, %c0_39, %c0_40], %54 {strides = array<i32>} : memref<2x8x128xf32, #tpu.memory_space<vmem>>, vector<2x8x128xf32>,
    } else {
    }
    return
  }
  func.func @transform_0(%arg0: i32, %arg1: i32, %arg2: i32) -> (i32, i32, i32) {
    %c0_i32 = arith.constant 0 : i32
    return %arg0, %arg1, %arg2 : i32, i32, i32
  }
  func.func @transform_1(%arg0: i32, %arg1: i32, %arg2: i32) -> (i32, i32, i32) {
    %c0_i32 = arith.constant 0 : i32
    %c0_i32_0 = arith.constant 0 : i32
    return %arg0, %arg2, %c0_i32 : i32, i32, i32
  }
  func.func @transform_2(%arg0: i32, %arg1: i32, %arg2: i32) -> (i32, i32, i32) {
    %c0_i32 = arith.constant 0 : i32
    %c0_i32_0 = arith.constant 0 : i32
    return %arg0, %arg1, %c0_i32 : i32, i32, i32
  }
  func.func @transform_3(%arg0: i32, %arg1: i32, %arg2: i32) -> (i32, i32) {
    %c0_i32 = arith.constant 0 : i32
    %c0_i32_0 = arith.constant 0 : i32
    %c0_i32_1 = arith.constant 0 : i32
    return %c0_i32, %c0_i32_0 : i32, i32
  }
  func.func @transform_4(%arg0: i32, %arg1: i32, %arg2: i32) -> (i32, i32) {
    %c0_i32 = arith.constant 0 : i32
    %c0_i32_0 = arith.constant 0 : i32
    %c0_i32_1 = arith.constant 0 : i32
    return %c0_i32, %c0_i32_0 : i32, i32
  }
  func.func @transform_5(%arg0: i32, %arg1: i32, %arg2: i32) -> (i32, i32) {
    %c0_i32 = arith.constant 0 : i32
    %c0_i32_0 = arith.constant 0 : i32
    %c0_i32_1 = arith.constant 0 : i32
    return %c0_i32, %c0_i32_0 : i32, i32
  }
  func.func @transform_6(%arg0: i32, %arg1: i32, %arg2: i32) -> (i32, i32) {
    %c0_i32 = arith.constant 0 : i32
    %c0_i32_0 = arith.constant 0 : i32
    %c0_i32_1 = arith.constant 0 : i32
    return %c0_i32, %c0_i32_0 : i32, i32
  }
  func.func @transform_7(%arg0: i32, %arg1: i32, %arg2: i32) -> (i32, i32, i32) {
    %c0_i32 = arith.constant 0 : i32
    %c0_i32_0 = arith.constant 0 : i32
    return %arg0, %arg1, %c0_i32 : i32, i32, i32
  }
}

</mosaic_0001>

<llo_original>
// kernel: tpu_custom_call.1
$region0: #{tpu_custom_call.1}
  #allocation0 [shape = 'u32[]', space=smem, size = 0x4, offset = 0x4, fixed_abs, tag = 'smem constant byte address 0x4 - core index']
  #allocation1 [shape = 'u32[144,128]{1,0:T(1,128)}', space=vmem, size = 0x12000, scoped, tag = 'internal scratch']
  #allocation2 [shape = 'f32[2,8,128]{2,1,0:T(8,128)}', space=vmem, size = 0x2000, scoped, tag = 'scratch operand']
  %s0 = inlined_call_operand.hbm [shape: f32[2,8,8], index: 0, kind: input, shape index: {}]
  %s1 = inlined_call_operand.hbm [shape: f32[2,8,128], index: 1, kind: input, shape index: {}]
  %s2 = inlined_call_operand.hbm [shape: f32[2,8,128], index: 2, kind: input, shape index: {}]
  %s3 = inlined_call_operand.hbm [shape: f32[128,384], index: 3, kind: input, shape index: {}]
  %s4 = inlined_call_operand.hbm [shape: f32[128,256], index: 4, kind: input, shape index: {}]
  %s5 = inlined_call_operand.hbm [shape: f32[128,128], index: 5, kind: input, shape index: {}]
  %s6 = inlined_call_operand.vmem [shape: f32[1,384], index: 6, kind: input, shape index: {}]
  %s7 = inlined_call_operand.hbm [shape: f32[2,8,128], index: 7, kind: output, shape index: {}]
  %s8 = sld [smem:[#allocation0]]
  $region70: #{tpu_custom_call.1} parent=0
    _
  %s10 = ssub.s32 1, %s8
  %s11 = scalar_select 0, %s10, %s8
  $region1: #{tpu_custom_call.1} parent=0
    #allocation3 [shape = 'u8[8192]{0}', space=vmem, size = 0x2000, scoped, tag = 'input window, operand 0, single buffered']
    #allocation4 [shape = 's32[1]{0}', space=sflag, size = 0x4, scoped, tag = 'scoped memory for tpu_custom_call.1']
    #allocation5 [shape = 's32[1]{0}', space=sflag, size = 0x4, scoped, tag = 'scoped memory for tpu_custom_call.1']
    #allocation6 [shape = 'u8[8192]{0}', space=vmem, size = 0x2000, scoped, tag = 'input window, operand 1, single buffered']
    #allocation7 [shape = 's32[1]{0}', space=sflag, size = 0x4, scoped, tag = 'scoped memory for tpu_custom_call.1']
    #allocation8 [shape = 'u8[8192]{0}', space=vmem, size = 0x2000, scoped, tag = 'input window, operand 2, single buffered']
    #allocation9 [shape = 'u8[196608]{0}', space=vmem, size = 0x30000, scoped, tag = 'input window, operand 3, single buffered']
    #allocation10 [shape = 's32[1]{0}', space=sflag, size = 0x4, scoped, tag = 'scoped memory for tpu_custom_call.1']
    #allocation11 [shape = 'u8[131072]{0}', space=vmem, size = 0x20000, scoped, tag = 'input window, operand 4, single buffered']
    #allocation12 [shape = 'u8[65536]{0}', space=vmem, size = 0x10000, scoped, tag = 'input window, operand 5, single buffered']
    #allocation13 [shape = 's32[1]{0}', space=sflag, size = 0x4, scoped, tag = 'scoped memory for tpu_custom_call.1']
    #allocation14 [shape = 'u8[8192]{0}', space=vmem, size = 0x2000, scoped, tag = 'output window, operand 0, single buffered']
    %12 = vsyncpa [#allocation4], 0
    %13 = vsyncpa [#allocation7], 0
    %14 = vsyncpa [#allocation10], 0
    %15 = vsyncpa [#allocation13], 0
    %16 = vsyncpa [#allocation5], 0
    // Predicated region
    $region2: #{tpu_custom_call.1} parent=1 // pred_check
      _
    $region3: #{tpu_custom_call.1} parent=1 // pred_check_branch
      %18 = sbr.rel (0) target = $region5
    $region4: #{tpu_custom_call.1} parent=1 // pred_region
      %s20 = ssub.s32 256, 256
      %21 = vsyncadd [#allocation4], %s20
      %s22 = sshll.u32 [#allocation3], 4
      %s23 = int_to_ptr.vmem [resolvable:$true] %s22
      %28 = dma.hbm_to_vmem [thread:$0]  %s0, 256, %s23, [#allocation4], 128, 128, 8
    $region5: #{tpu_custom_call.1} parent=1 // pred_fallthru
      _
    // Predicated region
    $region6: #{tpu_custom_call.1} parent=1 // pred_check
      _
    $region7: #{tpu_custom_call.1} parent=1 // pred_check_branch
      %30 = sbr.rel (0) target = $region9
    $region8: #{tpu_custom_call.1} parent=1 // pred_region
      %s32 = ssub.s32 256, 256
      %33 = vsyncadd [#allocation7], %s32
      %s34 = sshll.u32 [#allocation6], 4
      %s35 = int_to_ptr.vmem [resolvable:$true] %s34
      %40 = dma.hbm_to_vmem [thread:$0]  %s1, 256, %s35, [#allocation7], 128, 128, 8
    $region9: #{tpu_custom_call.1} parent=1 // pred_fallthru
      _
    // Predicated region
    $region10: #{tpu_custom_call.1} parent=1 // pred_check
      _
    $region11: #{tpu_custom_call.1} parent=1 // pred_check_branch
      %42 = sbr.rel (0) target = $region13
    $region12: #{tpu_custom_call.1} parent=1 // pred_region
      %s44 = ssub.s32 256, 256
      %45 = vsyncadd [#allocation7], %s44
      %s46 = sshll.u32 [#allocation8], 4
      %s47 = int_to_ptr.vmem [resolvable:$true] %s46
      %52 = dma.hbm_to_vmem [thread:$0]  %s2, 256, %s47, [#allocation7], 128, 128, 8
    $region13: #{tpu_custom_call.1} parent=1 // pred_fallthru
      _
    // Predicated region
    $region14: #{tpu_custom_call.1} parent=1 // pred_check
      _
    $region15: #{tpu_custom_call.1} parent=1 // pred_check_branch
      %54 = sbr.rel (0) target = $region17
    $region16: #{tpu_custom_call.1} parent=1 // pred_region
      %s56 = ssub.s32 6144, 6144
      %57 = vsyncadd [#allocation10], %s56
      %s58 = sshll.u32 [#allocation9], 4
      %s59 = int_to_ptr.vmem [resolvable:$true] %s58
      %64 = dma.hbm_to_vmem [thread:$0]  %s3, 6144, %s59, [#allocation10], 384, 384, 24
    $region17: #{tpu_custom_call.1} parent=1 // pred_fallthru
      _
    // Predicated region
    $region18: #{tpu_custom_call.1} parent=1 // pred_check
      _
    $region19: #{tpu_custom_call.1} parent=1 // pred_check_branch
      %66 = sbr.rel (0) target = $region21
    $region20: #{tpu_custom_call.1} parent=1 // pred_region
      %s68 = ssub.s32 4096, 4096
      %69 = vsyncadd [#allocation10], %s68
      %s70 = sshll.u32 [#allocation11], 4
      %s71 = int_to_ptr.vmem [resolvable:$true] %s70
      %76 = dma.hbm_to_vmem [thread:$0]  %s4, 4096, %s71, [#allocation10], 256, 256, 16
    $region21: #{tpu_custom_call.1} parent=1 // pred_fallthru
      _
    // Predicated region
    $region22: #{tpu_custom_call.1} parent=1 // pred_check
      _
    $region23: #{tpu_custom_call.1} parent=1 // pred_check_branch
      %78 = sbr.rel (0) target = $region25
    $region24: #{tpu_custom_call.1} parent=1 // pred_region
      %s80 = ssub.s32 2048, 2048
      %81 = vsyncadd [#allocation13], %s80
      %s82 = sshll.u32 [#allocation12], 4
      %s83 = int_to_ptr.vmem [resolvable:$true] %s82
      %88 = dma.hbm_to_vmem [thread:$0]  %s5, 2048, %s83, [#allocation13], 128, 128, 8
    $region25: #{tpu_custom_call.1} parent=1 // pred_fallthru
      _
    // Predicated region
    $region26: #{tpu_custom_call.1} parent=1 // pred_check
      _
    $region27: #{tpu_custom_call.1} parent=1 // pred_check_branch
      %90 = sbr.rel (0) target = $region29
    $region28: #{tpu_custom_call.1} parent=1 // pred_region
      _
    $region29: #{tpu_custom_call.1} parent=1 // pred_fallthru
      _
    // Predicated region
    $region30: #{tpu_custom_call.1} parent=1 // pred_check
      _
    $region31: #{tpu_custom_call.1} parent=1 // pred_check_branch
      %92 = sbr.rel (0) target = $region33
    $region32: #{tpu_custom_call.1} parent=1 // pred_region
      %93 = dma.done [#allocation4], 256
    $region33: #{tpu_custom_call.1} parent=1 // pred_fallthru
      _
    // Predicated region
    $region34: #{tpu_custom_call.1} parent=1 // pred_check
      _
    $region35: #{tpu_custom_call.1} parent=1 // pred_check_branch
      %95 = sbr.rel (0) target = $region37
    $region36: #{tpu_custom_call.1} parent=1 // pred_region
      %96 = dma.done [#allocation7], 256
    $region37: #{tpu_custom_call.1} parent=1 // pred_fallthru
      _
    // Predicated region
    $region38: #{tpu_custom_call.1} parent=1 // pred_check
      _
    $region39: #{tpu_custom_call.1} parent=1 // pred_check_branch
      %98 = sbr.rel (0) target = $region41
    $region40: #{tpu_custom_call.1} parent=1 // pred_region
      %99 = dma.done [#allocation7], 256
    $region41: #{tpu_custom_call.1} parent=1 // pred_fallthru
      _
    // Predicated region
    $region42: #{tpu_custom_call.1} parent=1 // pred_check
      _
    $region43: #{tpu_custom_call.1} parent=1 // pred_check_branch
      %101 = sbr.rel (0) target = $region45
    $region44: #{tpu_custom_call.1} parent=1 // pred_region
      %102 = dma.done [#allocation10], 6144
    $region45: #{tpu_custom_call.1} parent=1 // pred_fallthru
      _
    // Predicated region
    $region46: #{tpu_custom_call.1} parent=1 // pred_check
      _
    $region47: #{tpu_custom_call.1} parent=1 // pred_check_branch
      %104 = sbr.rel (0) target = $region49
    $region48: #{tpu_custom_call.1} parent=1 // pred_region
      %105 = dma.done [#allocation10], 4096
    $region49: #{tpu_custom_call.1} parent=1 // pred_fallthru
      _
    // Predicated region
    $region50: #{tpu_custom_call.1} parent=1 // pred_check
      _
    $region51: #{tpu_custom_call.1} parent=1 // pred_check_branch
      %107 = sbr.rel (0) target = $region53
    $region52: #{tpu_custom_call.1} parent=1 // pred_region
      %108 = dma.done [#allocation13], 2048
    $region53: #{tpu_custom_call.1} parent=1 // pred_fallthru
      _
    %p109 = scmp.eq.s32.totalorder 0, 0
    // Predicated region
    $region54: #{tpu_custom_call.1} parent=1 // pred_check
      %p110 = pneg %p109
    $region55: #{tpu_custom_call.1} parent=1 // pred_check_branch
      %112 = sbr.rel (%p110) target = $region57
    $region56: #{tpu_custom_call.1} parent=1 // pred_region
      %113 = vst [vmem:[#allocation2] sm:$0xff] 0.0
      %114 = vst [vmem:[#allocation2 + $0x8] sm:$0xff] 0.0
    $region57: #{tpu_custom_call.1} parent=1 // pred_fallthru
      _
    %v115 = vld [vmem:[#allocation2] sm:$0xff]
    %v116 = vld [vmem:[#allocation2 + $0x8] sm:$0xff]
    %v117 = vld [vmem:[#allocation3] sm:$0xff]
    %v118 = vld [vmem:[#allocation3 + $0x8] sm:$0xff]
    %v119 = vld [vmem:[#allocation6] sm:$0xff]
    %v120 = vld [vmem:[#allocation6 + $0x8] sm:$0xff]
    %vm121 = vcmask 64512
    %v123 = vsel %vm121, %v117, 0
    %125 = vmatprep.subr.mxu0 0.0
    %126 = vmatpush1.msra.mxu0 %v119
    %127 = vmatprep.subr.mxu0 0.0
    %128 = vmatpush1.msra.mxu0 0.0
    %129 = vmatprep.subr.mxu0 0.0
    %130 = vmatpush1.msra.mxu0 0.0
    %131 = vmatprep.subr.mxu0 0.0
    %132 = vmatpush1.msra.mxu0 0.0
    %133 = vmatprep.subr.mxu0 0.0
    %134 = vmatpush1.msra.mxu0 0.0
    %135 = vmatprep.subr.mxu0 0.0
    %136 = vmatpush1.msra.mxu0 0.0
    %137 = vmatprep.subr.mxu0 0.0
    %138 = vmatpush1.msra.mxu0 0.0
    %139 = vmatprep.subr.mxu0 0.0
    %140 = vmatpush1.msra.mxu0 0.0
    %141 = vmatprep.subr.mxu0 0.0
    %142 = vmatpush1.msra.mxu0 0.0
    %143 = vmatprep.subr.mxu0 0.0
    %144 = vmatpush1.msra.mxu0 0.0
    %145 = vmatprep.subr.mxu0 0.0
    %146 = vmatpush1.msra.mxu0 0.0
    %147 = vmatprep.subr.mxu0 0.0
    %148 = vmatpush1.msra.mxu0 0.0
    %149 = vmatprep.subr.mxu0 0.0
    %150 = vmatpush1.msra.mxu0 0.0
    %151 = vmatprep.subr.mxu0 0.0
    %152 = vmatpush1.msra.mxu0 0.0
    %153 = vmatprep.subr.mxu0 0.0
    %154 = vmatpush1.msra.mxu0 0.0
    %155 = vmatprep.subr.mxu0 0.0
    %156 = vmatpush1.msra.mxu0 0.0
    %157 = vmatprep.subr.mxu0 0.0
    %158 = vmatpush1.msra.mxu0 0.0
    %159 = vmatprep.subr.mxu0 0.0
    %160 = vmatpush1.msra.mxu0 0.0
    %161 = vmatprep.subr.mxu0 0.0
    %162 = vmatpush1.msra.mxu0 0.0
    %163 = vmatprep.subr.mxu0 0.0
    %164 = vmatpush1.msra.mxu0 0.0
    %165 = vmatprep.subr.mxu0 0.0
    %166 = vmatpush1.msra.mxu0 0.0
    %167 = vmatprep.subr.mxu0 0.0
    %168 = vmatpush1.msra.mxu0 0.0
    %169 = vmatprep.subr.mxu0 0.0
    %170 = vmatpush1.msra.mxu0 0.0
    %171 = vmatprep.subr.mxu0 0.0
    %172 = vmatpush1.msra.mxu0 0.0
    %173 = vmatprep.subr.mxu0 0.0
    %174 = vmatpush1.msra.mxu0 0.0
    %175 = vmatprep.subr.mxu0 0.0
    %176 = vmatpush1.msra.mxu0 0.0
    %177 = vmatprep.subr.mxu0 0.0
    %178 = vmatpush1.msra.mxu0 0.0
    %179 = vmatprep.subr.mxu0 0.0
    %180 = vmatpush1.msra.mxu0 0.0
    %181 = vmatprep.subr.mxu0 0.0
    %182 = vmatpush1.msra.mxu0 0.0
    %183 = vmatprep.subr.mxu0 0.0
    %184 = vmatpush1.msra.mxu0 0.0
    %185 = vmatprep.subr.mxu0 0.0
    %186 = vmatpush1.msra.mxu0 0.0
    %187 = vmatprep.subr.mxu0 0.0
    %188 = vmatpush1.msra.mxu0 0.0
    %189 = vmatprep.mubr.f32.mxu0 0.0
    %190 = vmatmul.mubr.f32.gmra.mrb[0].mxu0 %v123
    %v191 = vpop.f32.mrb[0].mxu0
    %v192 = vadd.f32 0.0, %v191
    %v193 = vpop.f32.mrb[0].mxu0
    %194 = vdwg.mxu0
    %v196 = vsel %vm121, %v118, 0
    %198 = vmatprep.subr.mxu0 0.0
    %199 = vmatpush1.msra.mxu0 %v120
    %200 = vmatprep.subr.mxu0 0.0
    %201 = vmatpush1.msra.mxu0 0.0
    %202 = vmatprep.subr.mxu0 0.0
    %203 = vmatpush1.msra.mxu0 0.0
    %204 = vmatprep.subr.mxu0 0.0
    %205 = vmatpush1.msra.mxu0 0.0
    %206 = vmatprep.subr.mxu0 0.0
    %207 = vmatpush1.msra.mxu0 0.0
    %208 = vmatprep.subr.mxu0 0.0
    %209 = vmatpush1.msra.mxu0 0.0
    %210 = vmatprep.subr.mxu0 0.0
    %211 = vmatpush1.msra.mxu0 0.0
    %212 = vmatprep.subr.mxu0 0.0
    %213 = vmatpush1.msra.mxu0 0.0
    %214 = vmatprep.subr.mxu0 0.0
    %215 = vmatpush1.msra.mxu0 0.0
    %216 = vmatprep.subr.mxu0 0.0
    %217 = vmatpush1.msra.mxu0 0.0
    %218 = vmatprep.subr.mxu0 0.0
    %219 = vmatpush1.msra.mxu0 0.0
    %220 = vmatprep.subr.mxu0 0.0
    %221 = vmatpush1.msra.mxu0 0.0
    %222 = vmatprep.subr.mxu0 0.0
    %223 = vmatpush1.msra.mxu0 0.0
    %224 = vmatprep.subr.mxu0 0.0
    %225 = vmatpush1.msra.mxu0 0.0
    %226 = vmatprep.subr.mxu0 0.0
    %227 = vmatpush1.msra.mxu0 0.0
    %228 = vmatprep.subr.mxu0 0.0
    %229 = vmatpush1.msra.mxu0 0.0
    %230 = vmatprep.subr.mxu0 0.0
    %231 = vmatpush1.msra.mxu0 0.0
    %232 = vmatprep.subr.mxu0 0.0
    %233 = vmatpush1.msra.mxu0 0.0
    %234 = vmatprep.subr.mxu0 0.0
    %235 = vmatpush1.msra.mxu0 0.0
    %236 = vmatprep.subr.mxu0 0.0
    %237 = vmatpush1.msra.mxu0 0.0
    %238 = vmatprep.subr.mxu0 0.0
    %239 = vmatpush1.msra.mxu0 0.0
    %240 = vmatprep.subr.mxu0 0.0
    %241 = vmatpush1.msra.mxu0 0.0
    %242 = vmatprep.subr.mxu0 0.0
    %243 = vmatpush1.msra.mxu0 0.0
    %244 = vmatprep.subr.mxu0 0.0
    %245 = vmatpush1.msra.mxu0 0.0
    %246 = vmatprep.subr.mxu0 0.0
    %247 = vmatpush1.msra.mxu0 0.0
    %248 = vmatprep.subr.mxu0 0.0
    %249 = vmatpush1.msra.mxu0 0.0
    %250 = vmatprep.subr.mxu0 0.0
    %251 = vmatpush1.msra.mxu0 0.0
    %252 = vmatprep.subr.mxu0 0.0
    %253 = vmatpush1.msra.mxu0 0.0
    %254 = vmatprep.subr.mxu0 0.0
    %255 = vmatpush1.msra.mxu0 0.0
    %256 = vmatprep.subr.mxu0 0.0
    %257 = vmatpush1.msra.mxu0 0.0
    %258 = vmatprep.subr.mxu0 0.0
    %259 = vmatpush1.msra.mxu0 0.0
    %260 = vmatprep.subr.mxu0 0.0
    %261 = vmatpush1.msra.mxu0 0.0
    %262 = vmatprep.mubr.f32.mxu0 0.0
    %263 = vmatmul.mubr.f32.gmra.mrb[0].mxu0 %v196
    %v264 = vpop.f32.mrb[0].mxu0
    %v265 = vadd.f32 0.0, %v264
    %v266 = vpop.f32.mrb[0].mxu0
    %267 = vdwg.mxu0
    %v268 = vadd.f32 %v115, %v192
    %v269 = vadd.f32 %v116, %v265
    %270 = vst [vmem:[#allocation2] sm:$0xff] %v268
    %271 = vst [vmem:[#allocation2 + $0x8] sm:$0xff] %v269
    // Predicated region
    $region58: #{tpu_custom_call.1} parent=1 // pred_check
      %p272 = pneg %p109
    $region59: #{tpu_custom_call.1} parent=1 // pred_check_branch
      %274 = sbr.rel (%p272) target = $region61
    $region60: #{tpu_custom_call.1} parent=1 // pred_region
      %v275 = vld [vmem:[#allocation2] sm:$0xff]
      %v276 = vld [vmem:[#allocation2 + $0x8] sm:$0xff]
      %v277 = vld [vmem:[#allocation8] sm:$0xff]
      %v278 = vld [vmem:[#allocation8 + $0x8] sm:$0xff]
      %v279 = vld [vmem:[#allocation9] sm:$0xff]
      %v280 = vld [vmem:[#allocation9 + $0x8] sm:$0xff]
      %v281 = vld [vmem:[#allocation9 + $0x10] sm:$0xff]
      %v282 = vld [vmem:[#allocation9 + $0x18] sm:$0xff]
      %v283 = vld [vmem:[#allocation9 + $0x20] sm:$0xff]
      %v284 = vld [vmem:[#allocation9 + $0x28] sm:$0xff]
      %v285 = vld [vmem:[#allocation9 + $0x30] sm:$0xff]
      %v286 = vld [vmem:[#allocation9 + $0x38] sm:$0xff]
      %v287 = vld [vmem:[#allocation9 + $0x40] sm:$0xff]
      %v288 = vld [vmem:[#allocation9 + $0x48] sm:$0xff]
      %v289 = vld [vmem:[#allocation9 + $0x50] sm:$0xff]
      %v290 = vld [vmem:[#allocation9 + $0x58] sm:$0xff]
      %v291 = vld [vmem:[#allocation9 + $0x60] sm:$0xff]
      %v292 = vld [vmem:[#allocation9 + $0x68] sm:$0xff]
      %v293 = vld [vmem:[#allocation9 + $0x70] sm:$0xff]
      %v294 = vld [vmem:[#allocation9 + $0x78] sm:$0xff]
      %v295 = vld [vmem:[#allocation9 + $0x80] sm:$0xff]
      %v296 = vld [vmem:[#allocation9 + $0x88] sm:$0xff]
      %v297 = vld [vmem:[#allocation9 + $0x90] sm:$0xff]
      %v298 = vld [vmem:[#allocation9 + $0x98] sm:$0xff]
      %v299 = vld [vmem:[#allocation9 + $0xa0] sm:$0xff]
      %v300 = vld [vmem:[#allocation9 + $0xa8] sm:$0xff]
      %v301 = vld [vmem:[#allocation9 + $0xb0] sm:$0xff]
      %v302 = vld [vmem:[#allocation9 + $0xb8] sm:$0xff]
      %v303 = vld [vmem:[#allocation9 + $0xc0] sm:$0xff]
      %v304 = vld [vmem:[#allocation9 + $0xc8] sm:$0xff]
      %v305 = vld [vmem:[#allocation9 + $0xd0] sm:$0xff]
      %v306 = vld [vmem:[#allocation9 + $0xd8] sm:$0xff]
      %v307 = vld [vmem:[#allocation9 + $0xe0] sm:$0xff]
      %v308 = vld [vmem:[#allocation9 + $0xe8] sm:$0xff]
      %v309 = vld [vmem:[#allocation9 + $0xf0] sm:$0xff]
      %v310 = vld [vmem:[#allocation9 + $0xf8] sm:$0xff]
      %v311 = vld [vmem:[#allocation9 + $0x100] sm:$0xff]
      %v312 = vld [vmem:[#allocation9 + $0x108] sm:$0xff]
      %v313 = vld [vmem:[#allocation9 + $0x110] sm:$0xff]
      %v314 = vld [vmem:[#allocation9 + $0x118] sm:$0xff]
      %v315 = vld [vmem:[#allocation9 + $0x120] sm:$0xff]
      %v316 = vld [vmem:[#allocation9 + $0x128] sm:$0xff]
      %v317 = vld [vmem:[#allocation9 + $0x130] sm:$0xff]
      %v318 = vld [vmem:[#allocation9 + $0x138] sm:$0xff]
      %v319 = vld [vmem:[#allocation9 + $0x140] sm:$0xff]
      %v320 = vld [vmem:[#allocation9 + $0x148] sm:$0xff]
      %v321 = vld [vmem:[#allocation9 + $0x150] sm:$0xff]
      %v322 = vld [vmem:[#allocation9 + $0x158] sm:$0xff]
      %v323 = vld [vmem:[#allocation9 + $0x160] sm:$0xff]
      %v324 = vld [vmem:[#allocation9 + $0x168] sm:$0xff]
      %v325 = vld [vmem:[#allocation9 + $0x170] sm:$0xff]
      %v326 = vld [vmem:[#allocation9 + $0x178] sm:$0xff]
      %v327 = vld [vmem:[%s6] sm:$0x7]
      %v329 = vlaneseq
      %v330 = vshrl.u32 %v329, 7
      %v331 = vsub.s32 0, %v330
      %v332 = vrot.slane %v327, %v331
      %v333 = vlaneseq
      %v334 = vshrl.u32 %v333, 7
      %v335 = vsub.s32 1, %v334
      %v336 = vrot.slane %v327, %v335
      %v337 = vlaneseq
      %v338 = vshrl.u32 %v337, 7
      %v339 = vsub.s32 2, %v338
      %v340 = vrot.slane %v327, %v339
      %344 = vmatprep.subr.mxu0 %v280
      %345 = vmatpush1.msra.mxu0 %v279
      %346 = vmatprep.subr.mxu0 %v283
      %347 = vmatpush1.msra.mxu0 %v282
      %348 = vmatprep.subr.mxu0 %v286
      %349 = vmatpush1.msra.mxu0 %v285
      %350 = vmatprep.subr.mxu0 %v289
      %351 = vmatpush1.msra.mxu0 %v288
      %352 = vmatprep.subr.mxu0 %v292
      %353 = vmatpush1.msra.mxu0 %v291
      %354 = vmatprep.subr.mxu0 %v295
      %355 = vmatpush1.msra.mxu0 %v294
      %356 = vmatprep.subr.mxu0 %v298
      %357 = vmatpush1.msra.mxu0 %v297
      %358 = vmatprep.subr.mxu0 %v301
      %359 = vmatpush1.msra.mxu0 %v300
      %360 = vmatprep.subr.mxu0 %v304
      %361 = vmatpush1.msra.mxu0 %v303
      %362 = vmatprep.subr.mxu0 %v307
      %363 = vmatpush1.msra.mxu0 %v306
      %364 = vmatprep.subr.mxu0 %v310
      %365 = vmatpush1.msra.mxu0 %v309
      %366 = vmatprep.subr.mxu0 %v313
      %367 = vmatpush1.msra.mxu0 %v312
      %368 = vmatprep.subr.mxu0 %v316
      %369 = vmatpush1.msra.mxu0 %v315
      %370 = vmatprep.subr.mxu0 %v319
      %371 = vmatpush1.msra.mxu0 %v318
      %372 = vmatprep.subr.mxu0 %v322
      %373 = vmatpush1.msra.mxu0 %v321
      %374 = vmatprep.subr.mxu0 %v325
      %375 = vmatpush1.msra.mxu0 %v324
      %376 = vmatprep.subr.mxu0 0.0
      %377 = vmatpush1.msra.mxu0 0.0
      %378 = vmatprep.subr.mxu0 0.0
      %379 = vmatpush1.msra.mxu0 0.0
      %380 = vmatprep.subr.mxu0 0.0
      %381 = vmatpush1.msra.mxu0 0.0
      %382 = vmatprep.subr.mxu0 0.0
      %383 = vmatpush1.msra.mxu0 0.0
      %384 = vmatprep.subr.mxu0 0.0
      %385 = vmatpush1.msra.mxu0 0.0
      %386 = vmatprep.subr.mxu0 0.0
      %387 = vmatpush1.msra.mxu0 0.0
      %388 = vmatprep.subr.mxu0 0.0
      %389 = vmatpush1.msra.mxu0 0.0
      %390 = vmatprep.subr.mxu0 0.0
      %391 = vmatpush1.msra.mxu0 0.0
      %392 = vmatprep.subr.mxu0 0.0
      %393 = vmatpush1.msra.mxu0 0.0
      %394 = vmatprep.subr.mxu0 0.0
      %395 = vmatpush1.msra.mxu0 0.0
      %396 = vmatprep.subr.mxu0 0.0
      %397 = vmatpush1.msra.mxu0 0.0
      %398 = vmatprep.subr.mxu0 0.0
      %399 = vmatpush1.msra.mxu0 0.0
      %400 = vmatprep.subr.mxu0 0.0
      %401 = vmatpush1.msra.mxu0 0.0
      %402 = vmatprep.subr.mxu0 0.0
      %403 = vmatpush1.msra.mxu0 0.0
      %404 = vmatprep.subr.mxu0 0.0
      %405 = vmatpush1.msra.mxu0 0.0
      %406 = vmatprep.subr.mxu0 0.0
      %407 = vmatpush1.msra.mxu0 0.0
      %408 = vmatprep.mubr.f32.mxu0 0.0
      %409 = vmatmul.mubr.f32.gmra.mrb[0].mxu0 %v275
      %v410 = vpop.f32.mrb[0].mxu0
      %v411 = vadd.f32 %v332, %v410
      %v412 = vpop.f32.mrb[0].mxu0
      %v413 = vadd.f32 %v336, %v412
      %414 = vmatprep.mubr.f32.mxu0 0.0
      %415 = vmatmul.mubr.f32.gmra.mrb[0].mxu0 %v276
      %v416 = vpop.f32.mrb[0].mxu0
      %v417 = vadd.f32 %v332, %v416
      %v418 = vpop.f32.mrb[0].mxu0
      %v419 = vadd.f32 %v336, %v418
      %420 = vdwg.mxu0
      %421 = vmatprep.subr.mxu0 0.0
      %422 = vmatpush1.msra.mxu0 %v281
      %423 = vmatprep.subr.mxu0 0.0
      %424 = vmatpush1.msra.mxu0 %v284
      %425 = vmatprep.subr.mxu0 0.0
      %426 = vmatpush1.msra.mxu0 %v287
      %427 = vmatprep.subr.mxu0 0.0
      %428 = vmatpush1.msra.mxu0 %v290
      %429 = vmatprep.subr.mxu0 0.0
      %430 = vmatpush1.msra.mxu0 %v293
      %431 = vmatprep.subr.mxu0 0.0
      %432 = vmatpush1.msra.mxu0 %v296
      %433 = vmatprep.subr.mxu0 0.0
      %434 = vmatpush1.msra.mxu0 %v299
      %435 = vmatprep.subr.mxu0 0.0
      %436 = vmatpush1.msra.mxu0 %v302
      %437 = vmatprep.subr.mxu0 0.0
      %438 = vmatpush1.msra.mxu0 %v305
      %439 = vmatprep.subr.mxu0 0.0
      %440 = vmatpush1.msra.mxu0 %v308
      %441 = vmatprep.subr.mxu0 0.0
      %442 = vmatpush1.msra.mxu0 %v311
      %443 = vmatprep.subr.mxu0 0.0
      %444 = vmatpush1.msra.mxu0 %v314
      %445 = vmatprep.subr.mxu0 0.0
      %446 = vmatpush1.msra.mxu0 %v317
      %447 = vmatprep.subr.mxu0 0.0
      %448 = vmatpush1.msra.mxu0 %v320
      %449 = vmatprep.subr.mxu0 0.0
      %450 = vmatpush1.msra.mxu0 %v323
      %451 = vmatprep.subr.mxu0 0.0
      %452 = vmatpush1.msra.mxu0 %v326
      %453 = vmatprep.subr.mxu0 0.0
      %454 = vmatpush1.msra.mxu0 0.0
      %455 = vmatprep.subr.mxu0 0.0
      %456 = vmatpush1.msra.mxu0 0.0
      %457 = vmatprep.subr.mxu0 0.0
      %458 = vmatpush1.msra.mxu0 0.0
      %459 = vmatprep.subr.mxu0 0.0
      %460 = vmatpush1.msra.mxu0 0.0
      %461 = vmatprep.subr.mxu0 0.0
      %462 = vmatpush1.msra.mxu0 0.0
      %463 = vmatprep.subr.mxu0 0.0
      %464 = vmatpush1.msra.mxu0 0.0
      %465 = vmatprep.subr.mxu0 0.0
      %466 = vmatpush1.msra.mxu0 0.0
      %467 = vmatprep.subr.mxu0 0.0
      %468 = vmatpush1.msra.mxu0 0.0
      %469 = vmatprep.subr.mxu0 0.0
      %470 = vmatpush1.msra.mxu0 0.0
      %471 = vmatprep.subr.mxu0 0.0
      %472 = vmatpush1.msra.mxu0 0.0
      %473 = vmatprep.subr.mxu0 0.0
      %474 = vmatpush1.msra.mxu0 0.0
      %475 = vmatprep.subr.mxu0 0.0
      %476 = vmatpush1.msra.mxu0 0.0
      %477 = vmatprep.subr.mxu0 0.0
      %478 = vmatpush1.msra.mxu0 0.0
      %479 = vmatprep.subr.mxu0 0.0
      %480 = vmatpush1.msra.mxu0 0.0
      %481 = vmatprep.subr.mxu0 0.0
      %482 = vmatpush1.msra.mxu0 0.0
      %483 = vmatprep.subr.mxu0 0.0
      %484 = vmatpush1.msra.mxu0 0.0
      %485 = vmatprep.mubr.f32.mxu0 0.0
      %486 = vmatmul.mubr.f32.gmra.mrb[0].mxu0 %v275
      %v487 = vpop.f32.mrb[0].mxu0
      %v488 = vadd.f32 %v340, %v487
      %v489 = vpop.f32.mrb[0].mxu0
      %490 = vmatprep.mubr.f32.mxu0 0.0
      %491 = vmatmul.mubr.f32.gmra.mrb[0].mxu0 %v276
      %v492 = vpop.f32.mrb[0].mxu0
      %v493 = vadd.f32 %v340, %v492
      %v494 = vpop.f32.mrb[0].mxu0
      %495 = vdwg.mxu0
      %v496 = vld [vmem:[#allocation11] sm:$0xff]
      %v497 = vld [vmem:[#allocation11 + $0x8] sm:$0xff]
      %v498 = vld [vmem:[#allocation11 + $0x10] sm:$0xff]
      %v499 = vld [vmem:[#allocation11 + $0x18] sm:$0xff]
      %v500 = vld [vmem:[#allocation11 + $0x20] sm:$0xff]
      %v501 = vld [vmem:[#allocation11 + $0x28] sm:$0xff]
      %v502 = vld [vmem:[#allocation11 + $0x30] sm:$0xff]
      %v503 = vld [vmem:[#allocation11 + $0x38] sm:$0xff]
      %v504 = vld [vmem:[#allocation11 + $0x40] sm:$0xff]
      %v505 = vld [vmem:[#allocation11 + $0x48] sm:$0xff]
      %v506 = vld [vmem:[#allocation11 + $0x50] sm:$0xff]
      %v507 = vld [vmem:[#allocation11 + $0x58] sm:$0xff]
      %v508 = vld [vmem:[#allocation11 + $0x60] sm:$0xff]
      %v509 = vld [vmem:[#allocation11 + $0x68] sm:$0xff]
      %v510 = vld [vmem:[#allocation11 + $0x70] sm:$0xff]
      %v511 = vld [vmem:[#allocation11 + $0x78] sm:$0xff]
      %v512 = vld [vmem:[#allocation11 + $0x80] sm:$0xff]
      %v513 = vld [vmem:[#allocation11 + $0x88] sm:$0xff]
      %v514 = vld [vmem:[#allocation11 + $0x90] sm:$0xff]
      %v515 = vld [vmem:[#allocation11 + $0x98] sm:$0xff]
      %v516 = vld [vmem:[#allocation11 + $0xa0] sm:$0xff]
      %v517 = vld [vmem:[#allocation11 + $0xa8] sm:$0xff]
      %v518 = vld [vmem:[#allocation11 + $0xb0] sm:$0xff]
      %v519 = vld [vmem:[#allocation11 + $0xb8] sm:$0xff]
      %v520 = vld [vmem:[#allocation11 + $0xc0] sm:$0xff]
      %v521 = vld [vmem:[#allocation11 + $0xc8] sm:$0xff]
      %v522 = vld [vmem:[#allocation11 + $0xd0] sm:$0xff]
      %v523 = vld [vmem:[#allocation11 + $0xd8] sm:$0xff]
      %v524 = vld [vmem:[#allocation11 + $0xe0] sm:$0xff]
      %v525 = vld [vmem:[#allocation11 + $0xe8] sm:$0xff]
      %v526 = vld [vmem:[#allocation11 + $0xf0] sm:$0xff]
      %v527 = vld [vmem:[#allocation11 + $0xf8] sm:$0xff]
      %528 = vmatprep.subr.mxu0 %v497
      %529 = vmatpush1.msra.mxu0 %v496
      %530 = vmatprep.subr.mxu0 %v499
      %531 = vmatpush1.msra.mxu0 %v498
      %532 = vmatprep.subr.mxu0 %v501
      %533 = vmatpush1.msra.mxu0 %v500
      %534 = vmatprep.subr.mxu0 %v503
      %535 = vmatpush1.msra.mxu0 %v502
      %536 = vmatprep.subr.mxu0 %v505
      %537 = vmatpush1.msra.mxu0 %v504
      %538 = vmatprep.subr.mxu0 %v507
      %539 = vmatpush1.msra.mxu0 %v506
      %540 = vmatprep.subr.mxu0 %v509
      %541 = vmatpush1.msra.mxu0 %v508
      %542 = vmatprep.subr.mxu0 %v511
      %543 = vmatpush1.msra.mxu0 %v510
      %544 = vmatprep.subr.mxu0 %v513
      %545 = vmatpush1.msra.mxu0 %v512
      %546 = vmatprep.subr.mxu0 %v515
      %547 = vmatpush1.msra.mxu0 %v514
      %548 = vmatprep.subr.mxu0 %v517
      %549 = vmatpush1.msra.mxu0 %v516
      %550 = vmatprep.subr.mxu0 %v519
      %551 = vmatpush1.msra.mxu0 %v518
      %552 = vmatprep.subr.mxu0 %v521
      %553 = vmatpush1.msra.mxu0 %v520
      %554 = vmatprep.subr.mxu0 %v523
      %555 = vmatpush1.msra.mxu0 %v522
      %556 = vmatprep.subr.mxu0 %v525
      %557 = vmatpush1.msra.mxu0 %v524
      %558 = vmatprep.subr.mxu0 %v527
      %559 = vmatpush1.msra.mxu0 %v526
      %560 = vmatprep.subr.mxu0 0.0
      %561 = vmatpush1.msra.mxu0 0.0
      %562 = vmatprep.subr.mxu0 0.0
      %563 = vmatpush1.msra.mxu0 0.0
      %564 = vmatprep.subr.mxu0 0.0
      %565 = vmatpush1.msra.mxu0 0.0
      %566 = vmatprep.subr.mxu0 0.0
      %567 = vmatpush1.msra.mxu0 0.0
      %568 = vmatprep.subr.mxu0 0.0
      %569 = vmatpush1.msra.mxu0 0.0
      %570 = vmatprep.subr.mxu0 0.0
      %571 = vmatpush1.msra.mxu0 0.0
      %572 = vmatprep.subr.mxu0 0.0
      %573 = vmatpush1.msra.mxu0 0.0
      %574 = vmatprep.subr.mxu0 0.0
      %575 = vmatpush1.msra.mxu0 0.0
      %576 = vmatprep.subr.mxu0 0.0
      %577 = vmatpush1.msra.mxu0 0.0
      %578 = vmatprep.subr.mxu0 0.0
      %579 = vmatpush1.msra.mxu0 0.0
      %580 = vmatprep.subr.mxu0 0.0
      %581 = vmatpush1.msra.mxu0 0.0
      %582 = vmatprep.subr.mxu0 0.0
      %583 = vmatpush1.msra.mxu0 0.0
      %584 = vmatprep.subr.mxu0 0.0
      %585 = vmatpush1.msra.mxu0 0.0
      %586 = vmatprep.subr.mxu0 0.0
      %587 = vmatpush1.msra.mxu0 0.0
      %588 = vmatprep.subr.mxu0 0.0
      %589 = vmatpush1.msra.mxu0 0.0
      %590 = vmatprep.subr.mxu0 0.0
      %591 = vmatpush1.msra.mxu0 0.0
      %592 = vmatprep.mubr.f32.mxu0 0.0
      %593 = vmatmul.mubr.f32.gmra.mrb[0].mxu0 %v277
      %v594 = vpop.f32.mrb[0].mxu0
      %v595 = vadd.f32 0.0, %v594
      %v596 = vpop.f32.mrb[0].mxu0
      %v597 = vadd.f32 0.0, %v596
      %598 = vmatprep.mubr.f32.mxu0 0.0
      %599 = vmatmul.mubr.f32.gmra.mrb[0].mxu0 %v278
      %v600 = vpop.f32.mrb[0].mxu0
      %v601 = vadd.f32 0.0, %v600
      %v602 = vpop.f32.mrb[0].mxu0
      %v603 = vadd.f32 0.0, %v602
      %604 = vdwg.mxu0
      %v605 = vadd.f32 %v411, %v595
      %v606 = vadd.f32 %v417, %v601
      %v607 = vmul.f32 %v605, 0.5
      %v608 = vmul.f32 %v606, 0.5
      %v609 = vtanh.pop %v607
      %v610 = vtanh.pop %v608
      %v611 = vadd.f32 %v609, 1.0
      %v612 = vadd.f32 %v610, 1.0
      %v613 = vmul.f32 %v611, 0.5
      %v614 = vmul.f32 %v612, 0.5
      %v615 = vadd.f32 %v413, %v597
      %v616 = vadd.f32 %v419, %v603
      %v617 = vmul.f32 %v615, 0.5
      %v618 = vmul.f32 %v616, 0.5
      %v619 = vtanh.pop %v617
      %v620 = vtanh.pop %v618
      %v621 = vadd.f32 %v619, 1.0
      %v622 = vadd.f32 %v620, 1.0
      %v623 = vmul.f32 %v621, 0.5
      %v624 = vmul.f32 %v622, 0.5
      %v625 = vmul.f32 %v623, %v277
      %v626 = vmul.f32 %v624, %v278
      %v627 = vld [vmem:[#allocation12] sm:$0xff]
      %v628 = vld [vmem:[#allocation12 + $0x8] sm:$0xff]
      %v629 = vld [vmem:[#allocation12 + $0x10] sm:$0xff]
      %v630 = vld [vmem:[#allocation12 + $0x18] sm:$0xff]
      %v631 = vld [vmem:[#allocation12 + $0x20] sm:$0xff]
      %v632 = vld [vmem:[#allocation12 + $0x28] sm:$0xff]
      %v633 = vld [vmem:[#allocation12 + $0x30] sm:$0xff]
      %v634 = vld [vmem:[#allocation12 + $0x38] sm:$0xff]
      %v635 = vld [vmem:[#allocation12 + $0x40] sm:$0xff]
      %v636 = vld [vmem:[#allocation12 + $0x48] sm:$0xff]
      %v637 = vld [vmem:[#allocation12 + $0x50] sm:$0xff]
      %v638 = vld [vmem:[#allocation12 + $0x58] sm:$0xff]
      %v639 = vld [vmem:[#allocation12 + $0x60] sm:$0xff]
      %v640 = vld [vmem:[#allocation12 + $0x68] sm:$0xff]
      %v641 = vld [vmem:[#allocation12 + $0x70] sm:$0xff]
      %v642 = vld [vmem:[#allocation12 + $0x78] sm:$0xff]
      %643 = vmatprep.subr.mxu0 0.0
      %644 = vmatpush1.msra.mxu0 %v627
      %645 = vmatprep.subr.mxu0 0.0
      %646 = vmatpush1.msra.mxu0 %v628
      %647 = vmatprep.subr.mxu0 0.0
      %648 = vmatpush1.msra.mxu0 %v629
      %649 = vmatprep.subr.mxu0 0.0
      %650 = vmatpush1.msra.mxu0 %v630
      %651 = vmatprep.subr.mxu0 0.0
      %652 = vmatpush1.msra.mxu0 %v631
      %653 = vmatprep.subr.mxu0 0.0
      %654 = vmatpush1.msra.mxu0 %v632
      %655 = vmatprep.subr.mxu0 0.0
      %656 = vmatpush1.msra.mxu0 %v633
      %657 = vmatprep.subr.mxu0 0.0
      %658 = vmatpush1.msra.mxu0 %v634
      %659 = vmatprep.subr.mxu0 0.0
      %660 = vmatpush1.msra.mxu0 %v635
      %661 = vmatprep.subr.mxu0 0.0
      %662 = vmatpush1.msra.mxu0 %v636
      %663 = vmatprep.subr.mxu0 0.0
      %664 = vmatpush1.msra.mxu0 %v637
      %665 = vmatprep.subr.mxu0 0.0
      %666 = vmatpush1.msra.mxu0 %v638
      %667 = vmatprep.subr.mxu0 0.0
      %668 = vmatpush1.msra.mxu0 %v639
      %669 = vmatprep.subr.mxu0 0.0
      %670 = vmatpush1.msra.mxu0 %v640
      %671 = vmatprep.subr.mxu0 0.0
      %672 = vmatpush1.msra.mxu0 %v641
      %673 = vmatprep.subr.mxu0 0.0
      %674 = vmatpush1.msra.mxu0 %v642
      %675 = vmatprep.subr.mxu0 0.0
      %676 = vmatpush1.msra.mxu0 0.0
      %677 = vmatprep.subr.mxu0 0.0
      %678 = vmatpush1.msra.mxu0 0.0
      %679 = vmatprep.subr.mxu0 0.0
      %680 = vmatpush1.msra.mxu0 0.0
      %681 = vmatprep.subr.mxu0 0.0
      %682 = vmatpush1.msra.mxu0 0.0
      %683 = vmatprep.subr.mxu0 0.0
      %684 = vmatpush1.msra.mxu0 0.0
      %685 = vmatprep.subr.mxu0 0.0
      %686 = vmatpush1.msra.mxu0 0.0
      %687 = vmatprep.subr.mxu0 0.0
      %688 = vmatpush1.msra.mxu0 0.0
      %689 = vmatprep.subr.mxu0 0.0
      %690 = vmatpush1.msra.mxu0 0.0
      %691 = vmatprep.subr.mxu0 0.0
      %692 = vmatpush1.msra.mxu0 0.0
      %693 = vmatprep.subr.mxu0 0.0
      %694 = vmatpush1.msra.mxu0 0.0
      %695 = vmatprep.subr.mxu0 0.0
      %696 = vmatpush1.msra.mxu0 0.0
      %697 = vmatprep.subr.mxu0 0.0
      %698 = vmatpush1.msra.mxu0 0.0
      %699 = vmatprep.subr.mxu0 0.0
      %700 = vmatpush1.msra.mxu0 0.0
      %701 = vmatprep.subr.mxu0 0.0
      %702 = vmatpush1.msra.mxu0 0.0
      %703 = vmatprep.subr.mxu0 0.0
      %704 = vmatpush1.msra.mxu0 0.0
      %705 = vmatprep.subr.mxu0 0.0
      %706 = vmatpush1.msra.mxu0 0.0
      %707 = vmatprep.mubr.f32.mxu0 0.0
      %708 = vmatmul.mubr.f32.gmra.mrb[0].mxu0 %v625
      %v709 = vpop.f32.mrb[0].mxu0
      %v710 = vadd.f32 0.0, %v709
      %v711 = vpop.f32.mrb[0].mxu0
      %712 = vmatprep.mubr.f32.mxu0 0.0
      %713 = vmatmul.mubr.f32.gmra.mrb[0].mxu0 %v626
      %v714 = vpop.f32.mrb[0].mxu0
      %v715 = vadd.f32 0.0, %v714
      %v716 = vpop.f32.mrb[0].mxu0
      %717 = vdwg.mxu0
      %v718 = vadd.f32 %v488, %v710
      %v719 = vadd.f32 %v493, %v715
      %v720 = vtanh.pop %v718
      %v721 = vtanh.pop %v719
      %v722 = vsub.f32 1.0, %v613
      %v723 = vsub.f32 1.0, %v614
      %v724 = vmul.f32 %v722, %v277
      %v725 = vmul.f32 %v723, %v278
      %v726 = vmul.f32 %v613, %v720
      %v727 = vmul.f32 %v614, %v721
      %v728 = vadd.f32 %v724, %v726
      %v729 = vadd.f32 %v725, %v727
      %730 = vst [vmem:[#allocation14] sm:$0xff] %v728
      %731 = vst [vmem:[#allocation14 + $0x8] sm:$0xff] %v729
    $region61: #{tpu_custom_call.1} parent=1 // pred_fallthru
      _
    // Predicated region
    $region62: #{tpu_custom_call.1} parent=1 // pred_check
      _
    $region63: #{tpu_custom_call.1} parent=1 // pred_check_branch
      %733 = sbr.rel (0) target = $region65
    $region64: #{tpu_custom_call.1} parent=1 // pred_region
      %s735 = ssub.s32 256, 256
      %736 = vsyncadd [#allocation5], %s735
      %s737 = sshll.u32 [#allocation14], 4
      %s738 = int_to_ptr.vmem [resolvable:$true] %s737
      %743 = dma.vmem_to_hbm [thread:$0]  %s738, 256, %s7, [#allocation5], 128, 128, 8
    $region65: #{tpu_custom_call.1} parent=1 // pred_fallthru
      _
    // Predicated region
    $region66: #{tpu_custom_call.1} parent=1 // pred_check
      _
    $region67: #{tpu_custom_call.1} parent=1 // pred_check_branch
      %745 = sbr.rel (0) target = $region69
    $region68: #{tpu_custom_call.1} parent=1 // pred_region
      %746 = dma.done [#allocation5], 256
    $region69: #{tpu_custom_call.1} parent=1 // pred_fallthru
      _
    %747 = vsyncpa [#allocation4], 1
    %748 = vsyncpa [#allocation7], 1
    %749 = vsyncpa [#allocation10], 1
    %750 = vsyncpa [#allocation13], 1
    %751 = vsyncpa [#allocation5], 1

</llo_original>
